<compile_context>
chip_gen: v7x
topology: tpu7x:2x2x1
jax: 0.10.0
libtpu: 0.0.40
codegen_flags: <defaults>
</compile_context>

<pallas_src>
import functools

import jax
import jax.numpy as jnp
from jax.experimental import pallas as pl
from jax.experimental.pallas import tpu as pltpu


def _round_up(x, m):
    return (x + m - 1) // m * m


def _vmem_capacity_bytes():
    # Generation-aware physical VMEM per TensorCore; conservative fallback (v7x = 64 MiB)
    # when no TPU is visible (e.g. interpret mode on CPU).
    try:
        info = pltpu.get_tpu_info()
        cap = int(getattr(info, "vmem_capacity_bytes", 0))
        if cap > 0:
            return cap
    except Exception:
        pass
    return 64 * 1024 * 1024


def _embed_kernel(ids_ref, word_ref, pos_ref, *rest, tokens_per_tile, seq_len,
                  vocab_size, apply_mask, use_onehot):
    # ids_ref : one-hot path -> VMEM int32 (T, 1) tile
    #           gather path  -> SMEM int32 (N_pad,) scalar-prefetch array
    # word_ref: VMEM (V, Dp) resident word-embedding table
    # pos_ref : VMEM (S, Dp) resident positional table (already sliced to seq_len)
    # rest    : ([mask_ref (T, Dp) f32], out_ref (T, Dp))
    if apply_mask:
        mask_ref, out_ref = rest
    else:
        (out_ref,) = rest
    T, S, V = tokens_per_tile, seq_len, vocab_size
    cdt = word_ref.dtype
    t = pl.program_id(0)
    base = t * T

    if use_onehot:
        # Word rows: one-hot (T, V) x (V, Dp) on the MXU -- no per-row loads/stores.
        ids = ids_ref[...]                                           # (T, 1) int32
        voc_i = jax.lax.broadcasted_iota(jnp.int32, (T, V), 1)
        tok_oh = (ids == voc_i).astype(cdt)
        tile = jnp.dot(tok_oh, word_ref[...], preferred_element_type=jnp.float32)

        # Positional rows: positions derived from the grid index; tiny (T,S)x(S,Dp).
        row_i = jax.lax.broadcasted_iota(jnp.int32, (T, S), 0)
        col_i = jax.lax.broadcasted_iota(jnp.int32, (T, S), 1)
        pos_oh = (((base + row_i) % S) == col_i).astype(cdt)
        tile = tile + jnp.dot(pos_oh, pos_ref[...], preferred_element_type=jnp.float32)

        if apply_mask:
            tile = tile * mask_ref[...]       # mask holds 0 or 1/(1-p); single store
        out_ref[...] = tile.astype(out_ref.dtype)
    else:
        # Large-vocab fallback: dynamic row gather from the resident table, batched
        # into (8, Dp) groups so every store is a full (8,128)-aligned slab, with the
        # positional add + dropout fused into the group store.
        n_groups = T // 8

        def do_group(g, carry):
            g0 = pl.multiple_of(g * 8, 8)
            rows = [word_ref[pl.ds(ids_ref[base + g0 + r], 1), :] for r in range(8)]
            grp = jnp.concatenate(rows, axis=0).astype(jnp.float32)          # (8, Dp)
            r_i = jax.lax.broadcasted_iota(jnp.int32, (8, S), 0)
            c_i = jax.lax.broadcasted_iota(jnp.int32, (8, S), 1)
            p_oh = (((base + g0 + r_i) % S) == c_i).astype(cdt)
            grp = grp + jnp.dot(p_oh, pos_ref[...], preferred_element_type=jnp.float32)
            if apply_mask:
                grp = grp * mask_ref[pl.ds(g0, 8), :]
            out_ref[pl.ds(g0, 8), :] = grp.astype(out_ref.dtype)
            return carry

        jax.lax.fori_loop(0, n_groups, do_group, 0, unroll=min(n_groups, 8))


def embedding_layer(input_ids, word_table, pos_table, dropout_p=0.1,
                    training=False, seed=0, token_tile=1024, use_onehot=None):
    """Pallas equivalent of EmbeddingLayer.forward.

    input_ids:  [B, S] int32
    word_table: [V, D]      (nn.Embedding(vocab_size, embedding_dim).weight)
    pos_table:  [S_max, D]  (nn.Embedding(sequence_length, embedding_dim).weight)
    returns:    [B, S, D] in word_table.dtype
    """
    B, S = input_ids.shape
    V, D = word_table.shape
    S_max, D2 = pos_table.shape
    assert D2 == D and S_max >= S

    out_dtype = word_table.dtype
    itemsize = jnp.dtype(out_dtype).itemsize
    apply_mask = bool(training) and float(dropout_p) > 0.0

    # Lane-dense output: pad D to a multiple of 128 (wrapper-side layout plumbing).
    Dp = _round_up(D, 128)
    if Dp != D:
        word_table = jnp.pad(word_table, ((0, 0), (0, Dp - D)))
        pos_table = jnp.pad(pos_table, ((0, 0), (0, Dp - D)))
    pos_used = pos_table[:S]

    # Tokens per grid step: big enough to amortize the ~0.35us/step overhead, capped
    # so the "parallel" axis has >= 2 tiles when there is enough work (v7x megacore).
    N = B * S
    two_tile_cap = _round_up(max(-(-N // 2), 8), 8)
    T = max(8, _round_up(min(int(token_tile), two_tile_cap), 8))
    n_tiles = -(-N // T)
    N_pad = n_tiles * T

    # One-hot MXU path for small/medium vocab; scalar-gather fallback otherwise.
    if use_onehot is None:
        use_onehot = V <= 4096
    use_onehot = bool(use_onehot)

    # Clamp guards against out-of-range ids (nn.Embedding would raise instead).
    ids = jnp.clip(input_ids.reshape(-1).astype(jnp.int32), 0, V - 1)
    if N_pad != N:
        ids = jnp.concatenate([ids, jnp.zeros((N_pad - N,), jnp.int32)])

    # VMEM budget (per TensorCore; on v7x each core keeps its own resident copy).
    capacity = _vmem_capacity_bytes()
    table_bytes = (V + S) * Dp * itemsize
    work_bytes = 2 * T * Dp * itemsize                 # double-buffered output tile
    if apply_mask:
        work_bytes += 2 * T * Dp * 4                   # double-buffered f32 mask tile
    if use_onehot:
        work_bytes += 2 * T * 4                        # double-buffered ids tile
    budget = (3 * capacity) // 4 - work_bytes
    # TODO(synk): very large vocab (table > VMEM budget): stream word-table rows from
    #             HBM (memory_space=pl.ANY + pltpu.make_async_copy) instead of the
    #             resident-table assumption below.
    assert table_bytes <= budget, (
        f"embedding tables ({table_bytes} B) exceed the per-core VMEM budget ({budget} B)")
    needed = table_bytes + work_bytes
    vmem_limit = max(needed + (8 << 20), 32 << 20)
    vmem_limit = int(min(vmem_limit, capacity - (16 << 20)))   # >=16 MiB headroom
    vmem_limit = max(vmem_limit, needed)

    if not use_onehot:
        # Scalar-prefetched ids live whole in SMEM (padded to next_pow2(4*N_pad)).
        # TODO(synk): block ids per tile (SMEM BlockSpec) for very large B*S.
        assert 4 * N_pad <= 256 * 1024, "gather path: ids exceed the SMEM ceiling"

    kernel = functools.partial(
        _embed_kernel, tokens_per_tile=T, seq_len=S, vocab_size=V,
        apply_mask=apply_mask, use_onehot=use_onehot)

    word_spec = pl.BlockSpec((V, Dp), lambda t, *_: (0, 0))    # resident, one DMA
    pos_spec = pl.BlockSpec((S, Dp), lambda t, *_: (0, 0))     # resident, one DMA
    tile_spec = pl.BlockSpec((T, Dp), lambda t, *_: (t, 0))    # lane-dense slab

    args = []
    in_specs = []
    if use_onehot:
        num_prefetch = 0
        args.append(ids.reshape(N_pad, 1))
        in_specs.append(pl.BlockSpec((T, 1), lambda t, *_: (t, 0)))
    else:
        num_prefetch = 1
        args.append(ids)                     # flat int32, scalar-prefetched into SMEM
    args += [word_table, pos_used]
    in_specs += [word_spec, pos_spec]

    if apply_mask:
        # Inverted-dropout keep/scale mask, generated with jax.random so the kernel
        # also lowers under interpret mode (TPU hw PRNG has no CPU lowering).
        # Stochastic: cannot bit-match torch's RNG stream; eval mode is the exact path.
        keep = jax.random.bernoulli(jax.random.PRNGKey(int(seed)),
                                    1.0 - float(dropout_p), (N_pad, Dp))
        mask = keep.astype(jnp.float32) * jnp.float32(1.0 / (1.0 - float(dropout_p)))
        args.append(mask)
        in_specs.append(tile_spec)

    flops = 2 * N_pad * Dp * ((V if use_onehot else 0) + S) + N_pad * Dp
    bytes_accessed = int(N_pad * 4 + table_bytes + N_pad * Dp * itemsize
                         + (N_pad * Dp * 4 if apply_mask else 0))

    out_flat = pl.pallas_call(
        kernel,
        out_shape=jax.ShapeDtypeStruct((N_pad, Dp), out_dtype),
        grid_spec=pltpu.PrefetchScalarGridSpec(
            num_scalar_prefetch=num_prefetch,
            grid=(n_tiles,),
            in_specs=in_specs,
            out_specs=tile_spec),
        compiler_params=pltpu.CompilerParams(
            dimension_semantics=("parallel",),
            vmem_limit_bytes=vmem_limit),
        cost_estimate=pl.CostEstimate(flops=int(flops), transcendentals=0,
                                      bytes_accessed=bytes_accessed),
    )(*args)

    return out_flat[:N, :D].reshape(B, S, D)


if __name__ == "__main__":
    # Small, deterministic configuration consistent with the module's __init__.
    vocab_size = 32
    embedding_dim = 128
    sequence_length = 8
    batch = 2

    key = jax.random.PRNGKey(0)
    k_w, k_p, k_ids = jax.random.split(key, 3)

    # nn.Embedding default init is N(0, 1)
    word_table = jax.random.normal(k_w, (vocab_size, embedding_dim), dtype=jnp.float32)
    pos_table = jax.random.normal(k_p, (sequence_length, embedding_dim), dtype=jnp.float32)
    input_ids = jax.random.randint(k_ids, (batch, sequence_length), 0, vocab_size,
                                   dtype=jnp.int32)

    ref = word_table[input_ids] + pos_table[:sequence_length][None, :, :]

    # 1) Eval mode, one-hot MXU path: exact match with the pure-JAX reference.
    out = jax.block_until_ready(embedding_layer(input_ids, word_table, pos_table,
                                                dropout_p=0.1, training=False))
    assert out.shape == (batch, sequence_length, embedding_dim)
    assert jnp.allclose(out, ref, atol=1e-5, rtol=1e-5)

    # 2) Eval mode, shape exercising token padding (B*S not multiple of 8) and S < S_max.
    ids2 = jax.random.randint(jax.random.PRNGKey(1), (3, 5), 0, vocab_size, dtype=jnp.int32)
    out2 = jax.block_until_ready(embedding_layer(ids2, word_table, pos_table,
                                                 dropout_p=0.1, training=False))
    ref2 = word_table[ids2] + pos_table[:5][None, :, :]
    assert jnp.allclose(out2, ref2, atol=1e-5, rtol=1e-5)

    # 3) Eval mode, large-vocab gather fallback path (forced): exact match.
    out3 = jax.block_until_ready(embedding_layer(input_ids, word_table, pos_table,
                                                 dropout_p=0.1, training=False,
                                                 use_onehot=False))
    assert jnp.allclose(out3, ref, atol=1e-5, rtol=1e-5)

    # 4) Training mode: every element is either dropped (0) or scaled by 1/(1-p).
    p = 0.1
    out4 = jax.block_until_ready(embedding_layer(input_ids, word_table, pos_table,
                                                 dropout_p=p, training=True, seed=7))
    assert out4.shape == (batch, sequence_length, embedding_dim)
    scaled = ref / (1.0 - p)
    ok = jnp.isclose(out4, 0.0, atol=1e-6) | jnp.isclose(out4, scaled, atol=1e-4, rtol=1e-4)
    assert bool(jnp.all(ok))

    print("KERNEL_OK")
</pallas_src>

<mosaic_0001>
module attributes {stable_mosaic.version = 11 : i64} {
  func.func @_embed_kernel(%arg0: i32, %arg1: memref<8x1xi32, #tpu.memory_space<vmem>>, %arg2: memref<32x128xf32, #tpu.memory_space<vmem>>, %arg3: memref<8x128xf32, #tpu.memory_space<vmem>>, %arg4: memref<8x128xf32, #tpu.memory_space<vmem>>) attributes {dimension_semantics = [#tpu.dimension_semantics<parallel>], iteration_bounds = array<i64: 2>, scalar_prefetch = 0 : i64, scratch_operands = 0 : i64, tpu.core_type = #tpu.core_type<tc>, window_params = [{transform_indices = @transform_0, window_bounds = array<i64: 8, 1>}, {pipeline_mode = #tpu.pipeline_mode<synchronous>, transform_indices = @transform_1, window_bounds = array<i64: 32, 128>}, {pipeline_mode = #tpu.pipeline_mode<synchronous>, transform_indices = @transform_2, window_bounds = array<i64: 8, 128>}, {transform_indices = @transform_3, window_bounds = array<i64: 8, 128>}]} {
    %c8_i32 = arith.constant 8 : i32
    %0 = arith.muli %arg0, %c8_i32 : i32
    %c0 = arith.constant 0 : index
    %c0_0 = arith.constant 0 : index
    %1 = vector.load %arg1[%c0, %c0_0] : memref<8x1xi32, #tpu.memory_space<vmem>>, vector<8x1xi32>
    %2 = tpu.iota {dimensions = array<i32: 1>} : vector<8x32xi32>
    %3 = vector.broadcast %1 : vector<8x1xi32> to vector<8x32xi32>
    %4 = arith.cmpi eq, %3, %2 : vector<8x32xi32>
    %5 = arith.extui %4 : vector<8x32xi1> to vector<8x32xi32>
    %6 = arith.sitofp %5 : vector<8x32xi32> to vector<8x32xf32>
    %c0_1 = arith.constant 0 : index
    %c0_2 = arith.constant 0 : index
    %7 = vector.load %arg2[%c0_1, %c0_2] : memref<32x128xf32, #tpu.memory_space<vmem>>, vector<32x128xf32>
    %cst = arith.constant dense<0.000000e+00> : vector<8x128xf32>
    %8 = tpu.matmul %6, %7, %cst {dimension_numbers = #tpu.dot_dimension_numbers<[1], [0], [0], [1], [0, 0, 1, 1], [], []>} : vector<8x32xf32>, vector<32x128xf32>, vector<8x128xf32> -> vector<8x128xf32>
    %9 = tpu.iota {dimensions = array<i32: 0>} : vector<8x8xi32>
    %10 = tpu.iota {dimensions = array<i32: 1>} : vector<8x8xi32>
    %11 = vector.broadcast %0 : i32 to vector<8x8xi32>
    %12 = arith.addi %11, %9 : vector<8x8xi32>
    %c8_i32_3 = arith.constant 8 : i32
    %c0_i32 = arith.constant 0 : i32
    %13 = arith.cmpi eq, %c8_i32_3, %c0_i32 : i32
    %c1_i32 = arith.constant 1 : i32
    %14 = arith.select %13, %c1_i32, %c8_i32_3 : i32
    %15 = vector.broadcast %14 : i32 to vector<8x8xi32>
    %16 = arith.remsi %12, %15 : vector<8x8xi32>
    %c0_i32_4 = arith.constant 0 : i32
    %17 = vector.broadcast %c0_i32_4 : i32 to vector<8x8xi32>
    %18 = arith.cmpi ne, %16, %17 : vector<8x8xi32>
    %c0_i32_5 = arith.constant 0 : i32
    %19 = vector.broadcast %c0_i32_5 : i32 to vector<8x8xi32>
    %20 = arith.cmpi slt, %16, %19 : vector<8x8xi32>
    %c0_i32_6 = arith.constant 0 : i32
    %21 = arith.cmpi slt, %14, %c0_i32_6 : i32
    %22 = vector.broadcast %21 : i1 to vector<8x8xi1>
    %23 = vector.broadcast %22 : vector<8x8xi1> to vector<8x8xi1>
    %24 = arith.xori %20, %23 : vector<8x8xi1>
    %25 = arith.andi %24, %18 : vector<8x8xi1>
    %26 = vector.broadcast %14 : i32 to vector<8x8xi32>
    %27 = arith.addi %16, %26 : vector<8x8xi32>
    %28 = arith.select %25, %27, %16 : vector<8x8xi1>, vector<8x8xi32>
    %29 = arith.cmpi eq, %28, %10 : vector<8x8xi32>
    %30 = arith.extui %29 : vector<8x8xi1> to vector<8x8xi32>
    %31 = arith.sitofp %30 : vector<8x8xi32> to vector<8x8xf32>
    %c0_7 = arith.constant 0 : index
    %c0_8 = arith.constant 0 : index
    %32 = vector.load %arg3[%c0_7, %c0_8] : memref<8x128xf32, #tpu.memory_space<vmem>>, vector<8x128xf32>
    %cst_9 = arith.constant dense<0.000000e+00> : vector<8x128xf32>
    %33 = tpu.matmul %31, %32, %cst_9 {dimension_numbers = #tpu.dot_dimension_numbers<[1], [0], [0], [1], [0, 0, 1, 1], [], []>} : vector<8x8xf32>, vector<8x128xf32>, vector<8x128xf32> -> vector<8x128xf32>
    %34 = arith.addf %8, %33 : vector<8x128xf32>
    %c0_10 = arith.constant 0 : index
    %c0_11 = arith.constant 0 : index
    %35 = vector.load %arg4[%c0_10, %c0_11] : memref<8x128xf32, #tpu.memory_space<vmem>>, vector<8x128xf32>
    tpu.vector_store %arg4[%c0_10, %c0_11], %34 {strides = array<i32>} : memref<8x128xf32, #tpu.memory_space<vmem>>, vector<8x128xf32>,
    return
  }
  func.func @transform_0(%arg0: i32) -> (i32, i32) {
    %c0_i32 = arith.constant 0 : i32
    %c0_i32_0 = arith.constant 0 : i32
    return %arg0, %c0_i32 : i32, i32
  }
  func.func @transform_1(%arg0: i32) -> (i32, i32) {
    %c0_i32 = arith.constant 0 : i32
    %c0_i32_0 = arith.constant 0 : i32
    %c0_i32_1 = arith.constant 0 : i32
    return %c0_i32, %c0_i32_0 : i32, i32
  }
  func.func @transform_2(%arg0: i32) -> (i32, i32) {
    %c0_i32 = arith.constant 0 : i32
    %c0_i32_0 = arith.constant 0 : i32
    %c0_i32_1 = arith.constant 0 : i32
    return %c0_i32, %c0_i32_0 : i32, i32
  }
  func.func @transform_3(%arg0: i32) -> (i32, i32) {
    %c0_i32 = arith.constant 0 : i32
    %c0_i32_0 = arith.constant 0 : i32
    return %arg0, %c0_i32 : i32, i32
  }
}

</mosaic_0001>

<llo_original>
// kernel: tpu_custom_call.1
$region0: #{tpu_custom_call.1}
  #allocation0 [shape = 'u32[]', space=smem, size = 0x4, offset = 0x4, fixed_abs, tag = 'smem constant byte address 0x4 - core index']
  #allocation1 [shape = 'u32[144,128]{1,0:T(1,128)}', space=vmem, size = 0x12000, scoped, tag = 'internal scratch']
  %s0 = inlined_call_operand.vmem [shape: s32[16,1], index: 0, kind: input, shape index: {}]
  %s1 = inlined_call_operand.hbm [shape: f32[32,128], index: 1, kind: input, shape index: {}]
  %s2 = inlined_call_operand.vmem [shape: f32[8,128], index: 2, kind: input, shape index: {}]
  %s3 = inlined_call_operand.hbm [shape: f32[16,128], index: 3, kind: output, shape index: {}]
  %s4 = sld [smem:[#allocation0]]
  $region49: #{tpu_custom_call.1} parent=0
    _
  %s6 = ssub.s32 1, %s4
  %s7 = scalar_select 0, %s6, %s4
  $region1: #{tpu_custom_call.1} parent=0
    #allocation2 [shape = 'u8[16384]{0}', space=vmem, size = 0x4000, scoped, tag = 'input window, operand 1, single buffered']
    #allocation3 [shape = 's32[2]{0}', space=sflag, size = 0x8, scoped, tag = 'scoped memory for tpu_custom_call.1']
    #allocation4 [shape = 's32[2]{0}', space=sflag, size = 0x8, scoped, tag = 'scoped memory for tpu_custom_call.1']
    #allocation5 [shape = 'u8[8192]{0}', space=vmem, size = 0x2000, scoped, tag = 'output window, operand 0']
    %8 = vsyncpa [#allocation3], 0
    %9 = vsyncpa [#allocation4], 0
    %s10 = scalar_lea.sflag [#allocation4], 1
    %11 = vsyncpa %s10, 0
    loop: start=0, step=1, limit=4
    $region2: #{tpu_custom_call.1} parent=1 // loop_pre_header
      _
    $region3: #{tpu_custom_call.1} parent=1 // loop_header
      %s13 = sphi 0, %s17
      %p14 = scmp.ge.s32.totalorder %s13, 4
      %s23 = sphi 0, %s25
      %s26 = sphi 0, %s23
      %s27 = sphi 0, %s26
      %s43 = sphi 0, %s27
      %s47 = sphi 0, %s47
      %s49 = sphi 0, %s47
      %s50 = sphi 0, %s49
      %s64 = sphi 0, %s50
      %s68 = sphi 0, %s68
      %s70 = sphi 0, %s68
      %s71 = sphi 0, %s70
      %s85 = sphi 0, %s71
      %s91 = sphi 0, %s93
      %s94 = sphi 0, %s91
      %s95 = sphi 0, %s94
      %s111 = sphi 0, %s95
    $region4: #{tpu_custom_call.1} parent=1 // loop_header_branch
      %16 = sbr.rel (%p14) target = $region8
    $region5: #{tpu_custom_call.1} parent=1 // loop_body
      %s18 = ssub.s32 %s13, 1
      %s19 = ssub.s32 %s13, 2
      %s20 = sadd.s32 %s13, 1
      %s21 = ssub.s32 %s13, %s20
      %p22 = scmp.eq.s32.totalorder %s21, 0
      %s24 = sadd.s32 %s23, 1
      %s25 = scalar_select %p22, %s23, %s24
      %p28 = pneg %p22
      %p29 = scmp.eq.s32.totalorder %s13, 1
      %p30 = por %p28, %p29
      %p31 = scmp.ne.s32.totalorder %s23, %s26
      %p32 = scmp.eq.s32.totalorder %s13, 0
      %p33 = por %p31, %p32
      %p34 = scmp.ne.s32.totalorder %s23, %s26
      %p35 = scmp.eq.s32.totalorder %s18, 1
      %p36 = por %p34, %p35
      %p37 = scmp.ne.s32.totalorder %s26, %s27
      %p38 = scmp.eq.s32.totalorder %s18, 0
      %p39 = por %p37, %p38
      %p40 = scmp.ne.s32.totalorder %s26, %s27
      %p41 = scmp.eq.s32.totalorder %s19, 1
      %p42 = por %p40, %p41
      %p44 = scmp.ne.s32.totalorder %s27, %s43
      %p45 = scmp.eq.s32.totalorder %s19, 0
      %p46 = por %p44, %p45
      %s48 = sadd.s32 %s47, 1
      %p51 = scmp.eq.s32.totalorder %s13, 1
      %p52 = scmp.ne.s32.totalorder %s47, %s49
      %p53 = scmp.eq.s32.totalorder %s13, 0
      %p54 = por %p52, %p53
      %p55 = scmp.ne.s32.totalorder %s47, %s49
      %p56 = scmp.eq.s32.totalorder %s18, 1
      %p57 = por %p55, %p56
      %p58 = scmp.ne.s32.totalorder %s49, %s50
      %p59 = scmp.eq.s32.totalorder %s18, 0
      %p60 = por %p58, %p59
      %p61 = scmp.ne.s32.totalorder %s49, %s50
      %p62 = scmp.eq.s32.totalorder %s19, 1
      %p63 = por %p61, %p62
      %p65 = scmp.ne.s32.totalorder %s50, %s64
      %p66 = scmp.eq.s32.totalorder %s19, 0
      %p67 = por %p65, %p66
      %s69 = sadd.s32 %s68, 1
      %p72 = scmp.eq.s32.totalorder %s13, 1
      %p73 = scmp.ne.s32.totalorder %s68, %s70
      %p74 = scmp.eq.s32.totalorder %s13, 0
      %p75 = por %p73, %p74
      %p76 = scmp.ne.s32.totalorder %s68, %s70
      %p77 = scmp.eq.s32.totalorder %s18, 1
      %p78 = por %p76, %p77
      %p79 = scmp.ne.s32.totalorder %s70, %s71
      %p80 = scmp.eq.s32.totalorder %s18, 0
      %p81 = por %p79, %p80
      %p82 = scmp.ne.s32.totalorder %s70, %s71
      %p83 = scmp.eq.s32.totalorder %s19, 1
      %p84 = por %p82, %p83
      %p86 = scmp.ne.s32.totalorder %s71, %s85
      %p87 = scmp.eq.s32.totalorder %s19, 0
      %p88 = por %p86, %p87
      %s89 = ssub.s32 %s13, %s20
      %p90 = scmp.eq.s32.totalorder %s89, 0
      %s92 = sadd.s32 %s91, 1
      %s93 = scalar_select %p90, %s91, %s92
      %p96 = pneg %p90
      %p97 = scmp.eq.s32.totalorder %s13, 1
      %p98 = por %p96, %p97
      %p99 = scmp.ne.s32.totalorder %s91, %s94
      %p100 = scmp.eq.s32.totalorder %s13, 0
      %p101 = por %p99, %p100
      %p102 = scmp.ne.s32.totalorder %s91, %s94
      %p103 = scmp.eq.s32.totalorder %s18, 1
      %p104 = por %p102, %p103
      %p105 = scmp.ne.s32.totalorder %s94, %s95
      %p106 = scmp.eq.s32.totalorder %s18, 0
      %p107 = por %p105, %p106
      %p108 = scmp.ne.s32.totalorder %s94, %s95
      %p109 = scmp.eq.s32.totalorder %s19, 1
      %p110 = por %p108, %p109
      %p112 = scmp.ne.s32.totalorder %s95, %s111
      %p113 = scmp.eq.s32.totalorder %s19, 0
      %p114 = por %p112, %p113
      %p115 = scmp.le.s32.totalorder 1, %s13
      %p116 = scmp.lt.s32.totalorder %s13, 3
      %p117 = pnand %p115, %p116
      %p118 = pneg %p117
      // Predicated region
      $region9: #{tpu_custom_call.1} parent=5 // pred_check
        _
      $region10: #{tpu_custom_call.1} parent=5 // pred_check_branch
        %120 = sbr.rel (%p117) target = $region12
      $region11: #{tpu_custom_call.1} parent=5 // pred_region
        %s121 = ssub.s32 %s13, 1
        // Predicated region
        $region13: #{tpu_custom_call.1} parent=11 // pred_check
          %p122 = pneg %p60
        $region14: #{tpu_custom_call.1} parent=11 // pred_check_branch
          %124 = sbr.rel (%p122) target = $region16
        $region15: #{tpu_custom_call.1} parent=11 // pred_region
          %s126 = ssub.s32 512, 512
          %127 = vsyncadd [#allocation3], %s126
          %s128 = sshll.u32 [#allocation2], 4
          %s129 = int_to_ptr.vmem [resolvable:$true] %s128
          %134 = dma.hbm_to_vmem [thread:$0]  %s1, 512, %s129, [#allocation3], 128, 128, 8
        $region16: #{tpu_custom_call.1} parent=11 // pred_fallthru
          _
        // Predicated region
        $region17: #{tpu_custom_call.1} parent=11 // pred_check
          %p135 = pneg %p81
        $region18: #{tpu_custom_call.1} parent=11 // pred_check_branch
          %137 = sbr.rel (%p135) target = $region20
        $region19: #{tpu_custom_call.1} parent=11 // pred_region
          _
        $region20: #{tpu_custom_call.1} parent=11 // pred_fallthru
          _
      $region12: #{tpu_custom_call.1} parent=5 // pred_fallthru
        _
      %p138 = scmp.lt.s32.totalorder %s13, 2
      // Predicated region
      $region21: #{tpu_custom_call.1} parent=5 // pred_check
        %p139 = pneg %p138
      $region22: #{tpu_custom_call.1} parent=5 // pred_check_branch
        %141 = sbr.rel (%p139) target = $region24
      $region23: #{tpu_custom_call.1} parent=5 // pred_region
        // Predicated region
        $region25: #{tpu_custom_call.1} parent=23 // pred_check
          %p142 = pneg %p33
        $region26: #{tpu_custom_call.1} parent=23 // pred_check_branch
          %144 = sbr.rel (%p142) target = $region28
        $region27: #{tpu_custom_call.1} parent=23 // pred_region
          %p145 = scmp.lt.s32.totalorder %s13, 1
          %s146 = scalar_select %p145, %s13, 1
          %s147 = smul.addr %s146, 8
          %s148 = scalar_lea.vmem %s0, %s147
        $region28: #{tpu_custom_call.1} parent=23 // pred_fallthru
          _
      $region24: #{tpu_custom_call.1} parent=5 // pred_fallthru
        _
      %p149 = scmp.le.s32.totalorder 1, %s13
      %p150 = scmp.lt.s32.totalorder %s13, 3
      %p151 = pnand %p149, %p150
      %p152 = pneg %p151
      // Predicated region
      $region29: #{tpu_custom_call.1} parent=5 // pred_check
        _
      $region30: #{tpu_custom_call.1} parent=5 // pred_check_branch
        %154 = sbr.rel (%p151) target = $region32
      $region31: #{tpu_custom_call.1} parent=5 // pred_region
        %s155 = ssub.s32 %s13, 1
        // Predicated region
        $region33: #{tpu_custom_call.1} parent=31 // pred_check
          %p156 = pneg %p60
        $region34: #{tpu_custom_call.1} parent=31 // pred_check_branch
          %158 = sbr.rel (%p156) target = $region36
        $region35: #{tpu_custom_call.1} parent=31 // pred_region
          %159 = dma.done [#allocation3], 512
        $region36: #{tpu_custom_call.1} parent=31 // pred_fallthru
          _
        %p160 = scmp.lt.s32.totalorder %s18, 1
        %s161 = scalar_select %p160, %s18, 1
        %s162 = smul.addr %s161, 8
        %s163 = scalar_lea.vmem %s0, %s162
        %p164 = pneg %p39
        %p165 = pneg %p36
        %p166 = pneg %p60
        %p167 = pneg %p57
        %p168 = pneg %p81
        %p169 = pneg %p78
        %p170 = pneg %p107
        %p171 = pneg %p104
        %s172 = sand.u32 %s94, 1
        %s173 = scalar_lea.sflag [#allocation4], %s172
        %s174 = sand.u32 %s94, 1
        %s175 = smul.addr %s174, 8
        %s176 = scalar_lea.vmem [#allocation5], %s175
        %p177 = scmp.lt.s32.totalorder %s18, 1
        %s178 = scalar_select %p177, %s18, 1
        %s179 = smul.addr %s178, 8
        %s180 = scalar_lea.vmem %s0, %s179
        %s181 = smul.u32 %s18, 8
        %v182 = vld [vmem:[%s180] sm:$0xff]
        %v183 = vlaneseq
        %v184 = vand.u32 %v183, 127
        %185 = vset.pattern.permute.xlu0 0
        %186 = vperm.xlu0 %185, %v182
        %v187 = vpop.permute.xlu0 %186
        %vm188 = vcmp.eq.s32.totalorder %v187, %v184
        %v189 = vsel %vm188, 1, 0
        %v190 = vcvt.s32.f32 %v189
        %v191 = vld [vmem:[#allocation2] sm:$0xff]
        %v192 = vld [vmem:[#allocation2 + $0x8] sm:$0xff]
        %v193 = vld [vmem:[#allocation2 + $0x10] sm:$0xff]
        %v194 = vld [vmem:[#allocation2 + $0x18] sm:$0xff]
        %v195 = vlaneseq
        %v196 = vshrl.u32 %v195, 7
        %v197 = vstv %s181
        %v198 = vadd.s32 %v197, %v196
        %vm199 = vcmp.lt.s32.totalorder %v198, 0
        %v200 = vsub.s32 0, %v198
        %v201 = vsel %vm199, %v200, %v198
        %v202 = vshrl.u32 %v201, 3
        %v203 = vand.u32 %v201, 7
        %v204 = vsub.s32 0, %v203
        %v205 = vsel %vm199, %v204, %v203
        %vm206 = vcmp.ne.s32.totalorder %v205, 0
        %vm207 = vcmp.lt.s32.totalorder %v205, 0
        %vm208 = vmand %vm207, %vm206
        %v209 = vadd.s32 %v205, 8
        %v210 = vsel %vm208, %v209, %v205
        %vm211 = vcmp.eq.s32.totalorder %v210, %v184
        %v212 = vsel %vm211, 1, 0
        %v213 = vcvt.s32.f32 %v212
        %v214 = vld [vmem:[%s2] sm:$0xff]
        %vm215 = vcmask 64512
        %v217 = vsel %vm215, %v213, 0
        %219 = vmatprep.subr.mxu0 0.0
        %220 = vmatpush1.msra.mxu0 %v214
        %221 = vmatprep.subr.mxu0 0.0
        %222 = vmatpush1.msra.mxu0 0.0
        %223 = vmatprep.subr.mxu0 0.0
        %224 = vmatpush1.msra.mxu0 0.0
        %225 = vmatprep.subr.mxu0 0.0
        %226 = vmatpush1.msra.mxu0 0.0
        %227 = vmatprep.subr.mxu0 0.0
        %228 = vmatpush1.msra.mxu0 0.0
        %229 = vmatprep.subr.mxu0 0.0
        %230 = vmatpush1.msra.mxu0 0.0
        %231 = vmatprep.subr.mxu0 0.0
        %232 = vmatpush1.msra.mxu0 0.0
        %233 = vmatprep.subr.mxu0 0.0
        %234 = vmatpush1.msra.mxu0 0.0
        %235 = vmatprep.subr.mxu0 0.0
        %236 = vmatpush1.msra.mxu0 0.0
        %237 = vmatprep.subr.mxu0 0.0
        %238 = vmatpush1.msra.mxu0 0.0
        %239 = vmatprep.subr.mxu0 0.0
        %240 = vmatpush1.msra.mxu0 0.0
        %241 = vmatprep.subr.mxu0 0.0
        %242 = vmatpush1.msra.mxu0 0.0
        %243 = vmatprep.subr.mxu0 0.0
        %244 = vmatpush1.msra.mxu0 0.0
        %245 = vmatprep.subr.mxu0 0.0
        %246 = vmatpush1.msra.mxu0 0.0
        %247 = vmatprep.subr.mxu0 0.0
        %248 = vmatpush1.msra.mxu0 0.0
        %249 = vmatprep.subr.mxu0 0.0
        %250 = vmatpush1.msra.mxu0 0.0
        %251 = vmatprep.subr.mxu0 0.0
        %252 = vmatpush1.msra.mxu0 0.0
        %253 = vmatprep.subr.mxu0 0.0
        %254 = vmatpush1.msra.mxu0 0.0
        %255 = vmatprep.subr.mxu0 0.0
        %256 = vmatpush1.msra.mxu0 0.0
        %257 = vmatprep.subr.mxu0 0.0
        %258 = vmatpush1.msra.mxu0 0.0
        %259 = vmatprep.subr.mxu0 0.0
        %260 = vmatpush1.msra.mxu0 0.0
        %261 = vmatprep.subr.mxu0 0.0
        %262 = vmatpush1.msra.mxu0 0.0
        %263 = vmatprep.subr.mxu0 0.0
        %264 = vmatpush1.msra.mxu0 0.0
        %265 = vmatprep.subr.mxu0 0.0
        %266 = vmatpush1.msra.mxu0 0.0
        %267 = vmatprep.subr.mxu0 0.0
        %268 = vmatpush1.msra.mxu0 0.0
        %269 = vmatprep.subr.mxu0 0.0
        %270 = vmatpush1.msra.mxu0 0.0
        %271 = vmatprep.subr.mxu0 0.0
        %272 = vmatpush1.msra.mxu0 0.0
        %273 = vmatprep.subr.mxu0 0.0
        %274 = vmatpush1.msra.mxu0 0.0
        %275 = vmatprep.subr.mxu0 0.0
        %276 = vmatpush1.msra.mxu0 0.0
        %277 = vmatprep.subr.mxu0 0.0
        %278 = vmatpush1.msra.mxu0 0.0
        %279 = vmatprep.subr.mxu0 0.0
        %280 = vmatpush1.msra.mxu0 0.0
        %281 = vmatprep.subr.mxu0 0.0
        %282 = vmatpush1.msra.mxu0 0.0
        %283 = vmatprep.mubr.f32.mxu0 0.0
        %284 = vmatmul.mubr.f32.gmra.mrb[0].mxu0 %v217
        %v285 = vpop.f32.mrb[0].mxu0
        %v286 = vadd.f32 0.0, %v285
        %v287 = vpop.f32.mrb[0].mxu0
        %288 = vdwg.mxu0
        %vm289 = vcmask 261120
        %v291 = vsel %vm289, %v190, 0
        %293 = vmatprep.subr.mxu0 0.0
        %294 = vmatpush1.msra.mxu0 %v191
        %295 = vmatprep.subr.mxu0 0.0
        %296 = vmatpush1.msra.mxu0 %v192
        %297 = vmatprep.subr.mxu0 0.0
        %298 = vmatpush1.msra.mxu0 %v193
        %299 = vmatprep.subr.mxu0 0.0
        %300 = vmatpush1.msra.mxu0 %v194
        %301 = vmatprep.subr.mxu0 0.0
        %302 = vmatpush1.msra.mxu0 0.0
        %303 = vmatprep.subr.mxu0 0.0
        %304 = vmatpush1.msra.mxu0 0.0
        %305 = vmatprep.subr.mxu0 0.0
        %306 = vmatpush1.msra.mxu0 0.0
        %307 = vmatprep.subr.mxu0 0.0
        %308 = vmatpush1.msra.mxu0 0.0
        %309 = vmatprep.subr.mxu0 0.0
        %310 = vmatpush1.msra.mxu0 0.0
        %311 = vmatprep.subr.mxu0 0.0
        %312 = vmatpush1.msra.mxu0 0.0
        %313 = vmatprep.subr.mxu0 0.0
        %314 = vmatpush1.msra.mxu0 0.0
        %315 = vmatprep.subr.mxu0 0.0
        %316 = vmatpush1.msra.mxu0 0.0
        %317 = vmatprep.subr.mxu0 0.0
        %318 = vmatpush1.msra.mxu0 0.0
        %319 = vmatprep.subr.mxu0 0.0
        %320 = vmatpush1.msra.mxu0 0.0
        %321 = vmatprep.subr.mxu0 0.0
        %322 = vmatpush1.msra.mxu0 0.0
        %323 = vmatprep.subr.mxu0 0.0
        %324 = vmatpush1.msra.mxu0 0.0
        %325 = vmatprep.subr.mxu0 0.0
        %326 = vmatpush1.msra.mxu0 0.0
        %327 = vmatprep.subr.mxu0 0.0
        %328 = vmatpush1.msra.mxu0 0.0
        %329 = vmatprep.subr.mxu0 0.0
        %330 = vmatpush1.msra.mxu0 0.0
        %331 = vmatprep.subr.mxu0 0.0
        %332 = vmatpush1.msra.mxu0 0.0
        %333 = vmatprep.subr.mxu0 0.0
        %334 = vmatpush1.msra.mxu0 0.0
        %335 = vmatprep.subr.mxu0 0.0
        %336 = vmatpush1.msra.mxu0 0.0
        %337 = vmatprep.subr.mxu0 0.0
        %338 = vmatpush1.msra.mxu0 0.0
        %339 = vmatprep.subr.mxu0 0.0
        %340 = vmatpush1.msra.mxu0 0.0
        %341 = vmatprep.subr.mxu0 0.0
        %342 = vmatpush1.msra.mxu0 0.0
        %343 = vmatprep.subr.mxu0 0.0
        %344 = vmatpush1.msra.mxu0 0.0
        %345 = vmatprep.subr.mxu0 0.0
        %346 = vmatpush1.msra.mxu0 0.0
        %347 = vmatprep.subr.mxu0 0.0
        %348 = vmatpush1.msra.mxu0 0.0
        %349 = vmatprep.subr.mxu0 0.0
        %350 = vmatpush1.msra.mxu0 0.0
        %351 = vmatprep.subr.mxu0 0.0
        %352 = vmatpush1.msra.mxu0 0.0
        %353 = vmatprep.subr.mxu0 0.0
        %354 = vmatpush1.msra.mxu0 0.0
        %355 = vmatprep.subr.mxu0 0.0
        %356 = vmatpush1.msra.mxu0 0.0
        %357 = vmatprep.mubr.f32.mxu0 0.0
        %358 = vmatmul.mubr.f32.gmra.mrb[0].mxu0 %v291
        %v359 = vpop.f32.mrb[0].mxu0
        %v360 = vadd.f32 %v286, %v359
        %v361 = vpop.f32.mrb[0].mxu0
        %362 = vdwg.mxu0
        %363 = vst [vmem:[%s176] sm:$0xff] %v360
        %s364 = sand.u32 %s94, 1
        %s365 = scalar_lea.sflag [#allocation4], %s364
        %s366 = sand.u32 %s94, 1
        %s367 = smul.addr %s366, 8
        %s368 = scalar_lea.vmem [#allocation5], %s367
        // Predicated region
        $region37: #{tpu_custom_call.1} parent=31 // pred_check
          %p369 = pneg %p104
        $region38: #{tpu_custom_call.1} parent=31 // pred_check_branch
          %371 = sbr.rel (%p369) target = $region40
        $region39: #{tpu_custom_call.1} parent=31 // pred_region
          %s373 = ssub.s32 128, 128
          %374 = vsyncadd %s365, %s373
          %s375 = smul.addr %s18, 128
          %s376 = scalar_lea.hbm %s3, %s375
          %s378 = sshll.u32 %s368, 4
          %s379 = int_to_ptr.vmem [resolvable:$true] %s378
          %381 = dma.vmem_to_hbm [thread:$0]  %s379, 128, %s376, %s365
        $region40: #{tpu_custom_call.1} parent=31 // pred_fallthru
          _
      $region32: #{tpu_custom_call.1} parent=5 // pred_fallthru
        _
      %p382 = scmp.le.s32.totalorder 2, %s13
      // Predicated region
      $region41: #{tpu_custom_call.1} parent=5 // pred_check
        %p383 = pneg %p382
      $region42: #{tpu_custom_call.1} parent=5 // pred_check_branch
        %385 = sbr.rel (%p383) target = $region44
      $region43: #{tpu_custom_call.1} parent=5 // pred_region
        %s386 = ssub.s32 %s13, 2
        // Predicated region
        $region45: #{tpu_custom_call.1} parent=43 // pred_check
          %p387 = pneg %p110
        $region46: #{tpu_custom_call.1} parent=43 // pred_check_branch
          %389 = sbr.rel (%p387) target = $region48
        $region47: #{tpu_custom_call.1} parent=43 // pred_region
          %s390 = sand.u32 %s95, 1
          %s391 = scalar_lea.sflag [#allocation4], %s390
          %s392 = sand.u32 %s95, 1
          %s393 = smul.addr %s392, 8
          %s394 = scalar_lea.vmem [#allocation5], %s393
          %395 = dma.done %s391, 128
        $region48: #{tpu_custom_call.1} parent=43 // pred_fallthru
          _
      $region44: #{tpu_custom_call.1} parent=5 // pred_fallthru
        _
    $region6: #{tpu_custom_call.1} parent=1 // loop_footer
      %s17 = sadd.s32 1, %s13
    $region7: #{tpu_custom_call.1} parent=1 // loop_footer_branch
      %12 = sbr.rel target = $region3
    $region8: #{tpu_custom_call.1} parent=1 // loop_exit
      _
    %396 = vsyncpa [#allocation3], 1
    %s397 = scalar_lea.sflag [#allocation3], 1
    %398 = vsyncpa %s397, 1
    %399 = vsyncpa [#allocation4], 1
    %s400 = scalar_lea.sflag [#allocation4], 1
    %401 = vsyncpa %s400, 1

</llo_original>
